<compile_context>
chip_gen: v7x
topology: tpu7x:2x2x1
jax: 0.10.0
libtpu: 0.0.40
codegen_flags: <defaults>
</compile_context>

<pallas_src>
import jax
import jax.numpy as jnp
from jax.experimental import pallas as pl
from jax.experimental.pallas import tpu as pltpu


def _round_up(x, m):
    return (x + m - 1) // m * m


def _usernet_head_kernel(xs_ref, w1s_ref, w2_ref, bias_ref, o_ref):
    h_dim = w1s_ref.shape[-1]     # H
    c_pad = w2_ref.shape[-1]      # C padded up to a multiple of 128

    # fc1 as two MXU dots accumulated in f32 -- mathematically identical to
    # concat([x1, x2], -1) @ W1 but without the lane-axis concatenate.
    acc = jnp.dot(xs_ref[0], w1s_ref[0], preferred_element_type=jnp.float32)
    acc = acc + jnp.dot(xs_ref[1], w1s_ref[1],
                        preferred_element_type=jnp.float32)

    b1 = bias_ref[0:1, :h_dim]                    # (1, H) f32
    h = jnp.tanh(acc + b1)                        # f32 bias + tanh (EUP)

    # fc2 with a lane-dense (padded-to-128) output width.
    out = jnp.dot(h.astype(w2_ref.dtype), w2_ref[...],
                  preferred_element_type=jnp.float32)
    o_ref[...] = (out + bias_ref[1:2, :c_pad]).astype(o_ref.dtype)


def usernet_head(x1, x2, w1, b1, w2, b2, *, block_b=256):
    """UserNet head: fc2(tanh(fc1(concat([x1, x2], -1)))).

    x1, x2 : (B, H) f32 CLS features from the two encoder passes.
    w1     : (2H, H) f32 -- fc1 weight, pre-transposed to x @ W layout.
    b1     : (H,)   f32
    w2     : (H, C) f32 -- fc2 weight, x @ W layout.
    b2     : (C,)   f32
    """
    assert block_b % 8 == 0
    B, H = x1.shape
    C = w2.shape[1]

    # --- wrapper-side layout prep (padding / packing / dtype casts) ---
    bm = min(block_b, _round_up(B, 8))     # batch tile (multiple of 8 sublanes)
    Bp = _round_up(B, bm)                  # padded batch
    Cp = _round_up(C, 128)                 # lane-dense output width
    BW = max(H, Cp)                        # packed-bias lane width

    pad_b = Bp - B
    x1p = jnp.pad(x1, ((0, pad_b), (0, 0)))
    x2p = jnp.pad(x2, ((0, pad_b), (0, 0)))
    xs = jnp.stack([x1p, x2p], axis=0).astype(jnp.bfloat16)            # (2, Bp, H)
    w1s = jnp.stack([w1[:H, :], w1[H:, :]], axis=0).astype(jnp.bfloat16)  # (2, H, H)
    w2p = jnp.pad(w2, ((0, 0), (0, Cp - C))).astype(jnp.bfloat16)      # (H, Cp)
    bias = jnp.zeros((2, BW), jnp.float32)
    bias = bias.at[0, :H].set(b1).at[1, :C].set(b2)                    # packed biases

    nb = Bp // bm
    grid_spec = pltpu.PrefetchScalarGridSpec(
        num_scalar_prefetch=0,
        grid=(nb,),
        in_specs=[
            pl.BlockSpec((2, bm, H), lambda i: (0, i, 0)),   # activations: batch-tiled
            pl.BlockSpec((2, H, H), lambda i: (0, 0, 0)),    # W1 halves: resident
            pl.BlockSpec((H, Cp), lambda i: (0, 0)),         # W2: resident
            pl.BlockSpec((2, BW), lambda i: (0, 0)),         # biases: resident
        ],
        out_specs=pl.BlockSpec((bm, Cp), lambda i: (i, 0)),
    )

    out_padded = pl.pallas_call(
        _usernet_head_kernel,
        out_shape=jax.ShapeDtypeStruct((Bp, Cp), jnp.float32),
        grid_spec=grid_spec,
        compiler_params=pltpu.CompilerParams(
            dimension_semantics=("parallel",)),
    )(xs, w1s, w2p, bias)

    return out_padded[:B, :C]


def _linear_params(key, in_features, out_features):
    """torch.nn.Linear-style init (uniform +-1/sqrt(fan_in)); W returned
    pre-transposed to (in_features, out_features) so the kernel does x @ W."""
    kw, kb = jax.random.split(key)
    bound = 1.0 / (in_features ** 0.5)
    w = jax.random.uniform(kw, (in_features, out_features), jnp.float32,
                           minval=-bound, maxval=bound)
    b = jax.random.uniform(kb, (out_features,), jnp.float32,
                           minval=-bound, maxval=bound)
    return w, b


if __name__ == "__main__":
    # Small shapes consistent with the head: hidden H, classes C, batch B.
    B, H, C = 2, 32, 2
    key = jax.random.PRNGKey(0)
    k_x1, k_x2, k_fc1, k_fc2 = jax.random.split(key, 4)

    # Stand-ins for text_encoder(...)['last_hidden_state'][:, 0] of the two
    # inputs ("text" and "user").
    x1 = jax.random.normal(k_x1, (B, H), jnp.float32)
    x2 = jax.random.normal(k_x2, (B, H), jnp.float32)

    # fc1: Linear(2H -> H), fc2: Linear(H -> C).
    w1, b1 = _linear_params(k_fc1, 2 * H, H)
    w2, b2 = _linear_params(k_fc2, H, C)

    out = usernet_head(x1, x2, w1, b1, w2, b2)
    out = jax.block_until_ready(out)
    assert out.shape == (B, C)

    # Reference 1: same math with the same bf16 operand rounding as the kernel
    # (tight tolerance).
    xb = jnp.concatenate([x1, x2], -1).astype(jnp.bfloat16)
    h_ref = jnp.tanh(
        jnp.dot(xb, w1.astype(jnp.bfloat16),
                preferred_element_type=jnp.float32) + b1)
    ref_bf16 = jnp.dot(h_ref.astype(jnp.bfloat16), w2.astype(jnp.bfloat16),
                       preferred_element_type=jnp.float32) + b2
    assert jnp.allclose(out, ref_bf16, atol=1e-3, rtol=1e-3)

    # Reference 2: full-f32 PyTorch-semantics head (loose tolerance -- bf16
    # matmul operands introduce ~1e-2-level deviation, accumulation is f32).
    ref_f32 = jnp.tanh(jnp.concatenate([x1, x2], -1) @ w1 + b1) @ w2 + b2
    assert jnp.allclose(out, ref_f32, atol=5e-2, rtol=5e-2)

    print("KERNEL_OK")
</pallas_src>

<mosaic_0001>
module attributes {stable_mosaic.version = 11 : i64} {
  func.func @_usernet_head_kernel(%arg0: i32, %arg1: memref<2x8x32xbf16, #tpu.memory_space<vmem>>, %arg2: memref<2x32x32xbf16, #tpu.memory_space<vmem>>, %arg3: memref<32x128xbf16, #tpu.memory_space<vmem>>, %arg4: memref<2x128xf32, #tpu.memory_space<vmem>>, %arg5: memref<8x128xf32, #tpu.memory_space<vmem>>) attributes {dimension_semantics = [#tpu.dimension_semantics<parallel>], iteration_bounds = array<i64: 1>, scalar_prefetch = 0 : i64, scratch_operands = 0 : i64, tpu.core_type = #tpu.core_type<tc>, window_params = [{transform_indices = @transform_0, window_bounds = array<i64: 2, 8, 32>}, {pipeline_mode = #tpu.pipeline_mode<synchronous>, transform_indices = @transform_1, window_bounds = array<i64: 2, 32, 32>}, {pipeline_mode = #tpu.pipeline_mode<synchronous>, transform_indices = @transform_2, window_bounds = array<i64: 32, 128>}, {pipeline_mode = #tpu.pipeline_mode<synchronous>, transform_indices = @transform_3, window_bounds = array<i64: 2, 128>}, {transform_indices = @transform_4, window_bounds = array<i64: 8, 128>}]} {
    %c0 = arith.constant 0 : index
    %c0_0 = arith.constant 0 : index
    %c0_1 = arith.constant 0 : index
    %0 = vector.load %arg1[%c0, %c0_0, %c0_1] : memref<2x8x32xbf16, #tpu.memory_space<vmem>>, vector<1x8x32xbf16>
    %1 = vector.shape_cast %0 : vector<1x8x32xbf16> to vector<8x32xbf16>
    %c0_2 = arith.constant 0 : index
    %c0_3 = arith.constant 0 : index
    %c0_4 = arith.constant 0 : index
    %2 = vector.load %arg2[%c0_2, %c0_3, %c0_4] : memref<2x32x32xbf16, #tpu.memory_space<vmem>>, vector<1x32x32xbf16>
    %3 = vector.shape_cast %2 : vector<1x32x32xbf16> to vector<32x32xbf16>
    %cst = arith.constant dense<0.000000e+00> : vector<8x32xf32>
    %4 = tpu.matmul %1, %3, %cst {dimension_numbers = #tpu.dot_dimension_numbers<[1], [0], [0], [1], [0, 0, 1, 1], [], []>} : vector<8x32xbf16>, vector<32x32xbf16>, vector<8x32xf32> -> vector<8x32xf32>
    %c1 = arith.constant 1 : index
    %c0_5 = arith.constant 0 : index
    %c0_6 = arith.constant 0 : index
    %5 = vector.load %arg1[%c1, %c0_5, %c0_6] : memref<2x8x32xbf16, #tpu.memory_space<vmem>>, vector<1x8x32xbf16>
    %6 = vector.shape_cast %5 : vector<1x8x32xbf16> to vector<8x32xbf16>
    %c1_7 = arith.constant 1 : index
    %c0_8 = arith.constant 0 : index
    %c0_9 = arith.constant 0 : index
    %7 = vector.load %arg2[%c1_7, %c0_8, %c0_9] : memref<2x32x32xbf16, #tpu.memory_space<vmem>>, vector<1x32x32xbf16>
    %8 = vector.shape_cast %7 : vector<1x32x32xbf16> to vector<32x32xbf16>
    %cst_10 = arith.constant dense<0.000000e+00> : vector<8x32xf32>
    %9 = tpu.matmul %6, %8, %cst_10 {dimension_numbers = #tpu.dot_dimension_numbers<[1], [0], [0], [1], [0, 0, 1, 1], [], []>} : vector<8x32xbf16>, vector<32x32xbf16>, vector<8x32xf32> -> vector<8x32xf32>
    %10 = arith.addf %4, %9 : vector<8x32xf32>
    %c0_11 = arith.constant 0 : index
    %c0_12 = arith.constant 0 : index
    %11 = vector.load %arg4[%c0_11, %c0_12] : memref<2x128xf32, #tpu.memory_space<vmem>>, vector<1x32xf32>
    %12 = vector.broadcast %11 : vector<1x32xf32> to vector<8x32xf32>
    %13 = arith.addf %10, %12 : vector<8x32xf32>
    %14 = math.tanh %13 : vector<8x32xf32>
    %15 = arith.truncf %14 : vector<8x32xf32> to vector<8x32xbf16>
    %c0_13 = arith.constant 0 : index
    %c0_14 = arith.constant 0 : index
    %16 = vector.load %arg3[%c0_13, %c0_14] : memref<32x128xbf16, #tpu.memory_space<vmem>>, vector<32x128xbf16>
    %cst_15 = arith.constant dense<0.000000e+00> : vector<8x128xf32>
    %17 = tpu.matmul %15, %16, %cst_15 {dimension_numbers = #tpu.dot_dimension_numbers<[1], [0], [0], [1], [0, 0, 1, 1], [], []>} : vector<8x32xbf16>, vector<32x128xbf16>, vector<8x128xf32> -> vector<8x128xf32>
    %c1_16 = arith.constant 1 : index
    %c0_17 = arith.constant 0 : index
    %18 = vector.load %arg4[%c1_16, %c0_17] : memref<2x128xf32, #tpu.memory_space<vmem>>, vector<1x128xf32>
    %19 = vector.broadcast %18 : vector<1x128xf32> to vector<8x128xf32>
    %20 = arith.addf %17, %19 : vector<8x128xf32>
    %c0_18 = arith.constant 0 : index
    %c0_19 = arith.constant 0 : index
    %21 = vector.load %arg5[%c0_18, %c0_19] : memref<8x128xf32, #tpu.memory_space<vmem>>, vector<8x128xf32>
    tpu.vector_store %arg5[%c0_18, %c0_19], %20 {strides = array<i32>} : memref<8x128xf32, #tpu.memory_space<vmem>>, vector<8x128xf32>,
    return
  }
  func.func @transform_0(%arg0: i32) -> (i32, i32, i32) {
    %c0_i32 = arith.constant 0 : i32
    %c0_i32_0 = arith.constant 0 : i32
    %c0_i32_1 = arith.constant 0 : i32
    return %c0_i32, %arg0, %c0_i32_0 : i32, i32, i32
  }
  func.func @transform_1(%arg0: i32) -> (i32, i32, i32) {
    %c0_i32 = arith.constant 0 : i32
    %c0_i32_0 = arith.constant 0 : i32
    %c0_i32_1 = arith.constant 0 : i32
    %c0_i32_2 = arith.constant 0 : i32
    return %c0_i32, %c0_i32_0, %c0_i32_1 : i32, i32, i32
  }
  func.func @transform_2(%arg0: i32) -> (i32, i32) {
    %c0_i32 = arith.constant 0 : i32
    %c0_i32_0 = arith.constant 0 : i32
    %c0_i32_1 = arith.constant 0 : i32
    return %c0_i32, %c0_i32_0 : i32, i32
  }
  func.func @transform_3(%arg0: i32) -> (i32, i32) {
    %c0_i32 = arith.constant 0 : i32
    %c0_i32_0 = arith.constant 0 : i32
    %c0_i32_1 = arith.constant 0 : i32
    return %c0_i32, %c0_i32_0 : i32, i32
  }
  func.func @transform_4(%arg0: i32) -> (i32, i32) {
    %c0_i32 = arith.constant 0 : i32
    %c0_i32_0 = arith.constant 0 : i32
    return %arg0, %c0_i32 : i32, i32
  }
}

</mosaic_0001>

<llo_original>
// kernel: tpu_custom_call.1
$region0: #{tpu_custom_call.1}
  #allocation0 [shape = 'u32[]', space=smem, size = 0x4, offset = 0x4, fixed_abs, tag = 'smem constant byte address 0x4 - core index']
  #allocation1 [shape = 'u32[144,128]{1,0:T(1,128)}', space=vmem, size = 0x12000, scoped, tag = 'internal scratch']
  %s0 = inlined_call_operand.hbm [shape: bf16[2,8,32], index: 0, kind: input, shape index: {}]
  %s1 = inlined_call_operand.hbm [shape: bf16[2,32,32], index: 1, kind: input, shape index: {}]
  %s2 = inlined_call_operand.hbm [shape: bf16[32,128], index: 2, kind: input, shape index: {}]
  %s3 = inlined_call_operand.vmem [shape: f32[2,128], index: 3, kind: input, shape index: {}]
  %s4 = inlined_call_operand.hbm [shape: f32[8,128], index: 4, kind: output, shape index: {}]
  %s5 = sld [smem:[#allocation0]]
  $region38: #{tpu_custom_call.1} parent=0
    _
  %s7 = ssub.s32 1, %s5
  %s8 = scalar_select 0, %s7, %s5
  $region1: #{tpu_custom_call.1} parent=0
    #allocation2 [shape = 'u8[4096]{0}', space=vmem, size = 0x1000, scoped, tag = 'input window, operand 0, single buffered']
    #allocation3 [shape = 's32[1]{0}', space=sflag, size = 0x4, scoped, tag = 'scoped memory for tpu_custom_call.1']
    #allocation4 [shape = 's32[1]{0}', space=sflag, size = 0x4, scoped, tag = 'scoped memory for tpu_custom_call.1']
    #allocation5 [shape = 'u8[16384]{0}', space=vmem, size = 0x4000, scoped, tag = 'input window, operand 1, single buffered']
    #allocation6 [shape = 's32[1]{0}', space=sflag, size = 0x4, scoped, tag = 'scoped memory for tpu_custom_call.1']
    #allocation7 [shape = 'u8[8192]{0}', space=vmem, size = 0x2000, scoped, tag = 'input window, operand 2, single buffered']
    #allocation8 [shape = 'u8[4096]{0}', space=vmem, size = 0x1000, scoped, tag = 'output window, operand 0, single buffered']
    %9 = vsyncpa [#allocation3], 0
    %10 = vsyncpa [#allocation6], 0
    %11 = vsyncpa [#allocation4], 0
    // Predicated region
    $region2: #{tpu_custom_call.1} parent=1 // pred_check
      _
    $region3: #{tpu_custom_call.1} parent=1 // pred_check_branch
      %13 = sbr.rel (0) target = $region5
    $region4: #{tpu_custom_call.1} parent=1 // pred_region
      %s15 = ssub.s32 128, 128
      %16 = vsyncadd [#allocation3], %s15
      %s17 = sshll.u32 [#allocation2], 4
      %s18 = int_to_ptr.vmem [resolvable:$true] %s17
      %23 = dma.hbm_to_vmem [thread:$0]  %s0, 128, %s18, [#allocation3], 64, 64, 4
    $region5: #{tpu_custom_call.1} parent=1 // pred_fallthru
      _
    // Predicated region
    $region6: #{tpu_custom_call.1} parent=1 // pred_check
      _
    $region7: #{tpu_custom_call.1} parent=1 // pred_check_branch
      %25 = sbr.rel (0) target = $region9
    $region8: #{tpu_custom_call.1} parent=1 // pred_region
      %s27 = ssub.s32 512, 512
      %28 = vsyncadd [#allocation6], %s27
      %s29 = sshll.u32 [#allocation5], 4
      %s30 = int_to_ptr.vmem [resolvable:$true] %s29
      %35 = dma.hbm_to_vmem [thread:$0]  %s1, 512, %s30, [#allocation6], 64, 64, 4
    $region9: #{tpu_custom_call.1} parent=1 // pred_fallthru
      _
    // Predicated region
    $region10: #{tpu_custom_call.1} parent=1 // pred_check
      _
    $region11: #{tpu_custom_call.1} parent=1 // pred_check_branch
      %37 = sbr.rel (0) target = $region13
    $region12: #{tpu_custom_call.1} parent=1 // pred_region
      %s39 = ssub.s32 256, 256
      %40 = vsyncadd [#allocation6], %s39
      %s41 = sshll.u32 [#allocation7], 4
      %s42 = int_to_ptr.vmem [resolvable:$true] %s41
      %47 = dma.hbm_to_vmem [thread:$0]  %s2, 256, %s42, [#allocation6], 64, 64, 4
    $region13: #{tpu_custom_call.1} parent=1 // pred_fallthru
      _
    // Predicated region
    $region14: #{tpu_custom_call.1} parent=1 // pred_check
      _
    $region15: #{tpu_custom_call.1} parent=1 // pred_check_branch
      %49 = sbr.rel (0) target = $region17
    $region16: #{tpu_custom_call.1} parent=1 // pred_region
      _
    $region17: #{tpu_custom_call.1} parent=1 // pred_fallthru
      _
    // Predicated region
    $region18: #{tpu_custom_call.1} parent=1 // pred_check
      _
    $region19: #{tpu_custom_call.1} parent=1 // pred_check_branch
      %51 = sbr.rel (0) target = $region21
    $region20: #{tpu_custom_call.1} parent=1 // pred_region
      %52 = dma.done [#allocation3], 128
    $region21: #{tpu_custom_call.1} parent=1 // pred_fallthru
      _
    // Predicated region
    $region22: #{tpu_custom_call.1} parent=1 // pred_check
      _
    $region23: #{tpu_custom_call.1} parent=1 // pred_check_branch
      %54 = sbr.rel (0) target = $region25
    $region24: #{tpu_custom_call.1} parent=1 // pred_region
      %55 = dma.done [#allocation6], 512
    $region25: #{tpu_custom_call.1} parent=1 // pred_fallthru
      _
    // Predicated region
    $region26: #{tpu_custom_call.1} parent=1 // pred_check
      _
    $region27: #{tpu_custom_call.1} parent=1 // pred_check_branch
      %57 = sbr.rel (0) target = $region29
    $region28: #{tpu_custom_call.1} parent=1 // pred_region
      %58 = dma.done [#allocation6], 256
    $region29: #{tpu_custom_call.1} parent=1 // pred_fallthru
      _
    %v60 = vld [vmem:[#allocation2] sm:$0xf]
    %v61 = vld [vmem:[#allocation5] sm:$0xf]
    %v62 = vld [vmem:[#allocation5 + $0x4] sm:$0xf]
    %v63 = vld [vmem:[#allocation5 + $0x8] sm:$0xf]
    %v64 = vld [vmem:[#allocation5 + $0xc] sm:$0xf]
    %s65 = scalar_lea.vmem [#allocation2], 4
    %v66 = vld [vmem:[%s65] sm:$0xf]
    %s67 = scalar_lea.vmem [#allocation5], 16
    %v68 = vld [vmem:[%s67] sm:$0xf]
    %v69 = vld [vmem:[%s67 + $0x4] sm:$0xf]
    %v70 = vld [vmem:[%s67 + $0x8] sm:$0xf]
    %v71 = vld [vmem:[%s67 + $0xc] sm:$0xf]
    %v76 = vunpack.c.l.b16 %v68
    %v77 = vunpack.c.l.b16 %v69
    %v78 = vunpack.c.l.b16 %v70
    %v79 = vunpack.c.l.b16 %v71
    %v80 = vpack.c.b16 %v77, %v76
    %v81 = vpack.c.b16 %v79, %v78
    %vm84 = vcmask 261120
    %v86 = vsel %vm84, %v66, 0
    %88 = vmatprep.subr.bf16.mxu0 0
    %89 = vmatpush1.bf16.msra.mxu0 %v80
    %90 = vmatprep.subr.bf16.mxu0 0
    %91 = vmatpush1.bf16.msra.mxu0 %v81
    %92 = vmatprep.subr.bf16.mxu0 0
    %93 = vmatpush1.bf16.msra.mxu0 0
    %94 = vmatprep.subr.bf16.mxu0 0
    %95 = vmatpush1.bf16.msra.mxu0 0
    %96 = vmatprep.subr.bf16.mxu0 0
    %97 = vmatpush1.bf16.msra.mxu0 0
    %98 = vmatprep.subr.bf16.mxu0 0
    %99 = vmatpush1.bf16.msra.mxu0 0
    %100 = vmatprep.subr.bf16.mxu0 0
    %101 = vmatpush1.bf16.msra.mxu0 0
    %102 = vmatprep.subr.bf16.mxu0 0
    %103 = vmatpush1.bf16.msra.mxu0 0
    %104 = vmatprep.subr.bf16.mxu0 0
    %105 = vmatpush1.bf16.msra.mxu0 0
    %106 = vmatprep.subr.bf16.mxu0 0
    %107 = vmatpush1.bf16.msra.mxu0 0
    %108 = vmatprep.subr.bf16.mxu0 0
    %109 = vmatpush1.bf16.msra.mxu0 0
    %110 = vmatprep.subr.bf16.mxu0 0
    %111 = vmatpush1.bf16.msra.mxu0 0
    %112 = vmatprep.subr.bf16.mxu0 0
    %113 = vmatpush1.bf16.msra.mxu0 0
    %114 = vmatprep.subr.bf16.mxu0 0
    %115 = vmatpush1.bf16.msra.mxu0 0
    %116 = vmatprep.subr.bf16.mxu0 0
    %117 = vmatpush1.bf16.msra.mxu0 0
    %118 = vmatprep.subr.bf16.mxu0 0
    %119 = vmatpush1.bf16.msra.mxu0 0
    %120 = vmatprep.mubr.bf16.mxu0 0
    %121 = vmatmul.mubr.bf16.gmra.mrb[0].mxu0 %v86
    %v122 = vpop.f32.mrb[0].mxu0
    %v123 = vadd.f32 0.0, %v122
    %v124 = vpop.f32.mrb[0].mxu0
    %v125 = vpop.f32.mrb[0].mxu0
    %v126 = vpop.f32.mrb[0].mxu0
    %127 = vdwg.mxu0
    %v132 = vunpack.c.l.b16 %v61
    %v133 = vunpack.c.l.b16 %v62
    %v134 = vunpack.c.l.b16 %v63
    %v135 = vunpack.c.l.b16 %v64
    %v136 = vpack.c.b16 %v133, %v132
    %v137 = vpack.c.b16 %v135, %v134
    %v141 = vsel %vm84, %v60, 0
    %143 = vmatprep.subr.bf16.mxu0 0
    %144 = vmatpush1.bf16.msra.mxu0 %v136
    %145 = vmatprep.subr.bf16.mxu0 0
    %146 = vmatpush1.bf16.msra.mxu0 %v137
    %147 = vmatprep.subr.bf16.mxu0 0
    %148 = vmatpush1.bf16.msra.mxu0 0
    %149 = vmatprep.subr.bf16.mxu0 0
    %150 = vmatpush1.bf16.msra.mxu0 0
    %151 = vmatprep.subr.bf16.mxu0 0
    %152 = vmatpush1.bf16.msra.mxu0 0
    %153 = vmatprep.subr.bf16.mxu0 0
    %154 = vmatpush1.bf16.msra.mxu0 0
    %155 = vmatprep.subr.bf16.mxu0 0
    %156 = vmatpush1.bf16.msra.mxu0 0
    %157 = vmatprep.subr.bf16.mxu0 0
    %158 = vmatpush1.bf16.msra.mxu0 0
    %159 = vmatprep.subr.bf16.mxu0 0
    %160 = vmatpush1.bf16.msra.mxu0 0
    %161 = vmatprep.subr.bf16.mxu0 0
    %162 = vmatpush1.bf16.msra.mxu0 0
    %163 = vmatprep.subr.bf16.mxu0 0
    %164 = vmatpush1.bf16.msra.mxu0 0
    %165 = vmatprep.subr.bf16.mxu0 0
    %166 = vmatpush1.bf16.msra.mxu0 0
    %167 = vmatprep.subr.bf16.mxu0 0
    %168 = vmatpush1.bf16.msra.mxu0 0
    %169 = vmatprep.subr.bf16.mxu0 0
    %170 = vmatpush1.bf16.msra.mxu0 0
    %171 = vmatprep.subr.bf16.mxu0 0
    %172 = vmatpush1.bf16.msra.mxu0 0
    %173 = vmatprep.subr.bf16.mxu0 0
    %174 = vmatpush1.bf16.msra.mxu0 0
    %175 = vmatprep.mubr.bf16.mxu0 0
    %176 = vmatmul.mubr.bf16.gmra.mrb[0].mxu0 %v141
    %v177 = vpop.f32.mrb[0].mxu0
    %v178 = vadd.f32 %v123, %v177
    %v179 = vpop.f32.mrb[0].mxu0
    %v180 = vpop.f32.mrb[0].mxu0
    %v181 = vpop.f32.mrb[0].mxu0
    %182 = vdwg.mxu0
    %v183 = vld [vmem:[%s3] sm:$0x1]
    %v184 = vlaneseq
    %v185 = vshrl.u32 %v184, 7
    %v186 = vsub.s32 0, %v185
    %v187 = vrot.slane %v183, %v186
    %v188 = vadd.f32 %v178, %v187
    %v189 = vtanh.pop %v188
    %v190 = vpack.c.bf16 %v189, %v189
    %v191 = vld [vmem:[#allocation7] sm:$0xf]
    %v192 = vld [vmem:[#allocation7 + $0x4] sm:$0xf]
    %v193 = vld [vmem:[#allocation7 + $0x8] sm:$0xf]
    %v194 = vld [vmem:[#allocation7 + $0xc] sm:$0xf]
    %v195 = vld [vmem:[%s3 + $0x1] sm:$0x1]
    %v196 = vlaneseq
    %v197 = vshrl.u32 %v196, 7
    %v198 = vsub.s32 0, %v197
    %v199 = vrot.slane %v195, %v198
    %v204 = vunpack.c.l.b16 %v191
    %v205 = vunpack.c.l.b16 %v192
    %v206 = vunpack.c.l.b16 %v193
    %v207 = vunpack.c.l.b16 %v194
    %v208 = vpack.c.b16 %v205, %v204
    %v209 = vpack.c.b16 %v207, %v206
    %v213 = vsel %vm84, %v190, 0
    %215 = vmatprep.subr.bf16.mxu0 0
    %216 = vmatpush1.bf16.msra.mxu0 %v208
    %217 = vmatprep.subr.bf16.mxu0 0
    %218 = vmatpush1.bf16.msra.mxu0 %v209
    %219 = vmatprep.subr.bf16.mxu0 0
    %220 = vmatpush1.bf16.msra.mxu0 0
    %221 = vmatprep.subr.bf16.mxu0 0
    %222 = vmatpush1.bf16.msra.mxu0 0
    %223 = vmatprep.subr.bf16.mxu0 0
    %224 = vmatpush1.bf16.msra.mxu0 0
    %225 = vmatprep.subr.bf16.mxu0 0
    %226 = vmatpush1.bf16.msra.mxu0 0
    %227 = vmatprep.subr.bf16.mxu0 0
    %228 = vmatpush1.bf16.msra.mxu0 0
    %229 = vmatprep.subr.bf16.mxu0 0
    %230 = vmatpush1.bf16.msra.mxu0 0
    %231 = vmatprep.subr.bf16.mxu0 0
    %232 = vmatpush1.bf16.msra.mxu0 0
    %233 = vmatprep.subr.bf16.mxu0 0
    %234 = vmatpush1.bf16.msra.mxu0 0
    %235 = vmatprep.subr.bf16.mxu0 0
    %236 = vmatpush1.bf16.msra.mxu0 0
    %237 = vmatprep.subr.bf16.mxu0 0
    %238 = vmatpush1.bf16.msra.mxu0 0
    %239 = vmatprep.subr.bf16.mxu0 0
    %240 = vmatpush1.bf16.msra.mxu0 0
    %241 = vmatprep.subr.bf16.mxu0 0
    %242 = vmatpush1.bf16.msra.mxu0 0
    %243 = vmatprep.subr.bf16.mxu0 0
    %244 = vmatpush1.bf16.msra.mxu0 0
    %245 = vmatprep.subr.bf16.mxu0 0
    %246 = vmatpush1.bf16.msra.mxu0 0
    %247 = vmatprep.mubr.bf16.mxu0 0
    %248 = vmatmul.mubr.bf16.gmra.mrb[0].mxu0 %v213
    %v249 = vpop.f32.mrb[0].mxu0
    %v250 = vadd.f32 %v199, %v249
    %v251 = vpop.f32.mrb[0].mxu0
    %v252 = vpop.f32.mrb[0].mxu0
    %v253 = vpop.f32.mrb[0].mxu0
    %254 = vdwg.mxu0
    %255 = vst [vmem:[#allocation8] sm:$0xff] %v250
    // Predicated region
    $region30: #{tpu_custom_call.1} parent=1 // pred_check
      _
    $region31: #{tpu_custom_call.1} parent=1 // pred_check_branch
      %257 = sbr.rel (0) target = $region33
    $region32: #{tpu_custom_call.1} parent=1 // pred_region
      %s259 = ssub.s32 128, 128
      %260 = vsyncadd [#allocation4], %s259
      %s262 = sshll.u32 [#allocation8], 4
      %s263 = int_to_ptr.vmem [resolvable:$true] %s262
      %265 = dma.vmem_to_hbm [thread:$0]  %s263, 128, %s4, [#allocation4]
    $region33: #{tpu_custom_call.1} parent=1 // pred_fallthru
      _
    // Predicated region
    $region34: #{tpu_custom_call.1} parent=1 // pred_check
      _
    $region35: #{tpu_custom_call.1} parent=1 // pred_check_branch
      %267 = sbr.rel (0) target = $region37
    $region36: #{tpu_custom_call.1} parent=1 // pred_region
      %268 = dma.done [#allocation4], 128
    $region37: #{tpu_custom_call.1} parent=1 // pred_fallthru
      _
    %269 = vsyncpa [#allocation3], 1
    %270 = vsyncpa [#allocation6], 1
    %271 = vsyncpa [#allocation4], 1

</llo_original>
